<compile_context>
chip_gen: v7x
topology: tpu7x:2x2x1
jax: 0.10.0
libtpu: 0.0.40
codegen_flags: <defaults>
</compile_context>

<pallas_src>
import functools

import jax
import jax.numpy as jnp
from jax.experimental import pallas as pl
from jax.experimental.pallas import tpu as pltpu


# ---------------------------------------------------------------------------
# Pallas kernel: F frames of (MSE + L1-of-gradient) elementwise error,
# reduced over the leading (batch, frame) axes only.
#   pred_ref : (B, F, C, H*W)  native dtype -- block of F predicted frames
#   gt_ref   : (B, C, H*W)     native dtype -- ground truth (VMEM resident)
#   o_ref    : (C, H*W) f32    -- per-block partial-sum map (lane dense)
# ---------------------------------------------------------------------------
def _loss_anneal_kernel(pred_ref, gt_ref, o_ref, *, w):
    c, hw = gt_ref.shape[-2], gt_ref.shape[-1]

    # Border "keep/zero" masks on the row-major flattened lane axis, built
    # once per block (amortized over the F frames + gt in this block).
    col = jax.lax.broadcasted_iota(jnp.int32, (c, hw), 1)
    if (w & (w - 1)) == 0:
        xpos = col & (w - 1)          # power-of-two fast path (no integer mod)
    else:
        xpos = col % w
    first_col = xpos == 0             # x == 0 -> left neighbor is zero padding
    first_row = col < w               # y == 0 -> upper neighbor is zero padding

    def grad_l1(img):
        # |img[y,x-1]-img[y,x]| + |img[y-1,x]-img[y,x]| with zero-padded
        # borders: x-1 == roll by 1, y-1 == roll by W on the flattened lane
        # axis (XLU), border taps masked to zero (matches F.pad in PyTorch).
        ax = img.ndim - 1
        left = jnp.where(first_col, 0.0, pltpu.roll(img, shift=1, axis=ax))
        up = jnp.where(first_row, 0.0, pltpu.roll(img, shift=w, axis=ax))
        return jnp.abs(left - img) + jnp.abs(up - img)

    g = gt_ref[...].astype(jnp.float32)        # (B, C, HW)
    p = pred_ref[...].astype(jnp.float32)      # (B, F, C, HW)

    gg = grad_l1(g)                            # grad(gt): once per block
    diff = p - g[:, None]                      # broadcast gt over the F axis
    err = diff * diff + jnp.abs(grad_l1(p) - gg[:, None])   # (B, F, C, HW)

    # Defer the cross-lane reduction: only the leading (vreg-parallel) axes
    # are summed here; the single scalar reduce + anneal scale are done once
    # in the wrapper on the tiny (num_blocks, C, HW) partial tensor.
    o_ref[...] = jnp.sum(err, axis=(0, 1))


# ---------------------------------------------------------------------------
# Wrapper: free reshapes only (no transpose, no dtype copy) + pallas_call.
# ---------------------------------------------------------------------------
def loss_anneal(global_step, pred_i, ground_truth, *, alpha=0.9998, beta=100.0,
                frames_per_block=None):
    """pred_i: (B, N, C, H, W); ground_truth: (B, C, H, W) -> scalar loss."""
    B, N, C, H, W = pred_i.shape
    assert ground_truth.shape == (B, C, H, W), ground_truth.shape
    HW = H * W

    # Contiguous (free) reshapes; keep native dtype -> pred HBM traffic is 1x.
    pred_r = pred_i.reshape(B, N, C, HW)
    gt_r = ground_truth.reshape(B, C, HW)

    # --- frames per grid step, chosen against a double-buffered VMEM budget.
    itemsize = jnp.dtype(pred_i.dtype).itemsize
    frame_bytes = B * C * HW * itemsize
    budget = 16 * 1024 * 1024
    if frames_per_block is None:
        F = 1
        for f in range(1, N + 1):
            if N % f == 0 and 2 * f * frame_bytes <= budget:
                F = f
    else:
        F = int(frames_per_block)
    assert N % F == 0, (N, F)
    G = N // F   # number of independent ("parallel") grid blocks

    pred_spec = pl.BlockSpec((B, F, C, HW), lambda i: (0, i, 0, 0))
    if G >= 3:
        # Deeper input pipeline only pays when there are enough blocks.
        pred_spec = pl.BlockSpec((B, F, C, HW), lambda i: (0, i, 0, 0),
                                 pipeline_mode=pl.Buffered(3))

    # 2x (double buffer) + 1 compute copy of the pred block, gt (+ f32 copy),
    # plus slack; clamp to a limit that is safe on v5e/v6e (128 MiB physical)
    # and v7x (64 MiB physical).
    vmem_need = 3 * F * frame_bytes + 2 * B * C * HW * 4 + (2 << 20)
    vmem_limit = int(min(max(vmem_need, 32 * 1024 * 1024), 48 * 1024 * 1024))

    total = N * B * C * HW
    cost = pl.CostEstimate(
        flops=12 * total,
        transcendentals=0,
        bytes_accessed=total * itemsize + B * C * HW * itemsize + G * C * HW * 4,
    )

    partial = pl.pallas_call(
        functools.partial(_loss_anneal_kernel, w=W),
        out_shape=jax.ShapeDtypeStruct((G, C, HW), jnp.float32),
        grid=(G,),
        in_specs=[
            pred_spec,                                        # F frames / step
            pl.BlockSpec((B, C, HW), lambda i: (0, 0, 0)),    # gt, resident
        ],
        out_specs=pl.BlockSpec((None, C, HW), lambda i: (i, 0, 0)),
        compiler_params=pltpu.CompilerParams(
            dimension_semantics=("parallel",),                # blocks independent
            vmem_limit_bytes=vmem_limit),
        cost_estimate=cost,
    )(pred_r, gt_r)

    # Final tiny reduction + anneal scale (scalar math) outside the kernel.
    anneal = jnp.asarray(beta, jnp.float32) * (
        jnp.asarray(alpha, jnp.float32) ** jnp.asarray(global_step, jnp.float32))
    return jnp.sum(partial) * (anneal / jnp.asarray(total, jnp.float32))


# ---------------------------------------------------------------------------
# Pure-JAX reference (mirrors the PyTorch module) for a correctness check.
# ---------------------------------------------------------------------------
def _loss_anneal_ref(global_step, pred_i, ground_truth, alpha=0.9998, beta=100.0):
    def grad(img):  # img: (B, C, H, W)
        prev_x = jnp.pad(img, ((0, 0), (0, 0), (0, 0), (1, 0)))[..., :, :-1]
        prev_y = jnp.pad(img, ((0, 0), (0, 0), (1, 0), (0, 0)))[..., :-1, :]
        return jnp.abs(prev_x - img) + jnp.abs(prev_y - img)

    N = pred_i.shape[1]
    gg = grad(ground_truth)
    loss = 0.0
    for i in range(N):
        p = pred_i[:, i]
        loss = loss + jnp.mean((p - ground_truth) ** 2) \
                    + jnp.mean(jnp.abs(grad(p) - gg))
    loss = loss / N
    anneal = jnp.asarray(beta, jnp.float32) * (
        jnp.asarray(alpha, jnp.float32) ** jnp.asarray(global_step, jnp.float32))
    return anneal * loss


if __name__ == "__main__":
    key = jax.random.PRNGKey(0)
    k1, k2 = jax.random.split(key)

    B, N, C, H, W = 2, 4, 3, 16, 16
    pred_i = jax.random.normal(k1, (B, N, C, H, W), jnp.float32)
    ground_truth = jax.random.normal(k2, (B, C, H, W), jnp.float32)
    global_step = 1000

    fwd = jax.jit(loss_anneal)
    out = fwd(global_step, pred_i, ground_truth)
    out = jax.block_until_ready(out)

    ref = jax.block_until_ready(_loss_anneal_ref(global_step, pred_i, ground_truth))

    assert out.shape == (), out.shape
    assert bool(jnp.isfinite(out)), out
    assert jnp.allclose(out, ref, rtol=1e-4, atol=1e-4), (float(out), float(ref))
    print("KERNEL_OK")
</pallas_src>

<mosaic_0001>
module attributes {stable_mosaic.version = 11 : i64} {
  func.func @_loss_anneal_kernel(%arg0: i32, %arg1: memref<2x4x3x256xf32, #tpu.memory_space<vmem>>, %arg2: memref<2x3x256xf32, #tpu.memory_space<vmem>>, %arg3: memref<1x3x256xf32, #tpu.memory_space<vmem>>) attributes {dimension_semantics = [#tpu.dimension_semantics<parallel>], iteration_bounds = array<i64: 1>, scalar_prefetch = 0 : i64, scratch_operands = 0 : i64, tpu.core_type = #tpu.core_type<tc>, window_params = [{transform_indices = @transform_0, window_bounds = array<i64: 2, 4, 3, 256>}, {pipeline_mode = #tpu.pipeline_mode<synchronous>, transform_indices = @transform_1, window_bounds = array<i64: 2, 3, 256>}, {transform_indices = @transform_2, window_bounds = array<i64: 1, 3, 256>}]} {
    %0 = tpu.iota {dimensions = array<i32: 1>} : vector<3x256xi32>
    %c15_i32 = arith.constant 15 : i32
    %1 = vector.broadcast %c15_i32 : i32 to vector<3x256xi32>
    %2 = arith.andi %0, %1 : vector<3x256xi32>
    %c0_i32 = arith.constant 0 : i32
    %3 = vector.broadcast %c0_i32 : i32 to vector<3x256xi32>
    %4 = arith.cmpi eq, %2, %3 : vector<3x256xi32>
    %c16_i32 = arith.constant 16 : i32
    %5 = vector.broadcast %c16_i32 : i32 to vector<3x256xi32>
    %6 = arith.cmpi slt, %0, %5 : vector<3x256xi32>
    %c0 = arith.constant 0 : index
    %c0_0 = arith.constant 0 : index
    %c0_1 = arith.constant 0 : index
    %7 = vector.load %arg2[%c0, %c0_0, %c0_1] : memref<2x3x256xf32, #tpu.memory_space<vmem>>, vector<2x3x256xf32>
    %c0_2 = arith.constant 0 : index
    %c0_3 = arith.constant 0 : index
    %c0_4 = arith.constant 0 : index
    %c0_5 = arith.constant 0 : index
    %8 = vector.load %arg1[%c0_2, %c0_3, %c0_4, %c0_5] : memref<2x4x3x256xf32, #tpu.memory_space<vmem>>, vector<2x4x3x256xf32>
    %c1_i32 = arith.constant 1 : i32
    %9 = tpu.dynamic_rotate %7 by %c1_i32 dim 2 : vector<2x3x256xf32>, i32 -> vector<2x3x256xf32>
    %cst = arith.constant 0.000000e+00 : f32
    %10 = vector.shape_cast %4 : vector<3x256xi1> to vector<1x3x256xi1>
    %11 = vector.broadcast %10 : vector<1x3x256xi1> to vector<2x3x256xi1>
    %12 = vector.broadcast %cst : f32 to vector<2x3x256xf32>
    %13 = arith.select %11, %12, %9 : vector<2x3x256xi1>, vector<2x3x256xf32>
    %c16_i32_6 = arith.constant 16 : i32
    %14 = tpu.dynamic_rotate %7 by %c16_i32_6 dim 2 : vector<2x3x256xf32>, i32 -> vector<2x3x256xf32>
    %cst_7 = arith.constant 0.000000e+00 : f32
    %15 = vector.shape_cast %6 : vector<3x256xi1> to vector<1x3x256xi1>
    %16 = vector.broadcast %15 : vector<1x3x256xi1> to vector<2x3x256xi1>
    %17 = vector.broadcast %cst_7 : f32 to vector<2x3x256xf32>
    %18 = arith.select %16, %17, %14 : vector<2x3x256xi1>, vector<2x3x256xf32>
    %19 = arith.subf %13, %7 : vector<2x3x256xf32>
    %20 = math.absf %19 : vector<2x3x256xf32>
    %21 = arith.subf %18, %7 : vector<2x3x256xf32>
    %22 = math.absf %21 : vector<2x3x256xf32>
    %23 = arith.addf %20, %22 : vector<2x3x256xf32>
    %24 = vector.shape_cast %7 : vector<2x3x256xf32> to vector<2x1x3x256xf32>
    %25 = vector.broadcast %24 : vector<2x1x3x256xf32> to vector<2x4x3x256xf32>
    %26 = arith.subf %8, %25 : vector<2x4x3x256xf32>
    %27 = arith.mulf %26, %26 : vector<2x4x3x256xf32>
    %c1_i32_8 = arith.constant 1 : i32
    %28 = tpu.dynamic_rotate %8 by %c1_i32_8 dim 3 : vector<2x4x3x256xf32>, i32 -> vector<2x4x3x256xf32>
    %cst_9 = arith.constant 0.000000e+00 : f32
    %29 = vector.shape_cast %4 : vector<3x256xi1> to vector<1x1x3x256xi1>
    %30 = vector.broadcast %29 : vector<1x1x3x256xi1> to vector<2x4x3x256xi1>
    %31 = vector.broadcast %cst_9 : f32 to vector<2x4x3x256xf32>
    %32 = arith.select %30, %31, %28 : vector<2x4x3x256xi1>, vector<2x4x3x256xf32>
    %c16_i32_10 = arith.constant 16 : i32
    %33 = tpu.dynamic_rotate %8 by %c16_i32_10 dim 3 : vector<2x4x3x256xf32>, i32 -> vector<2x4x3x256xf32>
    %cst_11 = arith.constant 0.000000e+00 : f32
    %34 = vector.shape_cast %6 : vector<3x256xi1> to vector<1x1x3x256xi1>
    %35 = vector.broadcast %34 : vector<1x1x3x256xi1> to vector<2x4x3x256xi1>
    %36 = vector.broadcast %cst_11 : f32 to vector<2x4x3x256xf32>
    %37 = arith.select %35, %36, %33 : vector<2x4x3x256xi1>, vector<2x4x3x256xf32>
    %38 = arith.subf %32, %8 : vector<2x4x3x256xf32>
    %39 = math.absf %38 : vector<2x4x3x256xf32>
    %40 = arith.subf %37, %8 : vector<2x4x3x256xf32>
    %41 = math.absf %40 : vector<2x4x3x256xf32>
    %42 = arith.addf %39, %41 : vector<2x4x3x256xf32>
    %43 = vector.shape_cast %23 : vector<2x3x256xf32> to vector<2x1x3x256xf32>
    %44 = vector.broadcast %43 : vector<2x1x3x256xf32> to vector<2x4x3x256xf32>
    %45 = arith.subf %42, %44 : vector<2x4x3x256xf32>
    %46 = math.absf %45 : vector<2x4x3x256xf32>
    %47 = arith.addf %27, %46 : vector<2x4x3x256xf32>
    %cst_12 = arith.constant dense<0.000000e+00> : vector<3x256xf32>
    %48 = vector.multi_reduction <add>, %47, %cst_12 [0, 1] : vector<2x4x3x256xf32> to vector<3x256xf32>
    %c0_13 = arith.constant 0 : index
    %c0_14 = arith.constant 0 : index
    %c0_15 = arith.constant 0 : index
    %49 = vector.load %arg3[%c0_13, %c0_14, %c0_15] : memref<1x3x256xf32, #tpu.memory_space<vmem>>, vector<1x3x256xf32>
    %50 = vector.shape_cast %49 : vector<1x3x256xf32> to vector<3x256xf32>
    %51 = vector.shape_cast %48 : vector<3x256xf32> to vector<1x3x256xf32>
    tpu.vector_store %arg3[%c0_13, %c0_14, %c0_15], %51 {strides = array<i32>} : memref<1x3x256xf32, #tpu.memory_space<vmem>>, vector<1x3x256xf32>,
    return
  }
  func.func @transform_0(%arg0: i32) -> (i32, i32, i32, i32) {
    %c0_i32 = arith.constant 0 : i32
    %c0_i32_0 = arith.constant 0 : i32
    %c0_i32_1 = arith.constant 0 : i32
    %c0_i32_2 = arith.constant 0 : i32
    return %c0_i32, %arg0, %c0_i32_0, %c0_i32_1 : i32, i32, i32, i32
  }
  func.func @transform_1(%arg0: i32) -> (i32, i32, i32) {
    %c0_i32 = arith.constant 0 : i32
    %c0_i32_0 = arith.constant 0 : i32
    %c0_i32_1 = arith.constant 0 : i32
    %c0_i32_2 = arith.constant 0 : i32
    return %c0_i32, %c0_i32_0, %c0_i32_1 : i32, i32, i32
  }
  func.func @transform_2(%arg0: i32) -> (i32, i32, i32) {
    %c0_i32 = arith.constant 0 : i32
    %c0_i32_0 = arith.constant 0 : i32
    %c0_i32_1 = arith.constant 0 : i32
    return %arg0, %c0_i32, %c0_i32_0 : i32, i32, i32
  }
}

</mosaic_0001>

<llo_original>
// kernel: loss_anneal.1
$region0: #{loss_anneal.1}
  #allocation0 [shape = 'u32[]', space=smem, size = 0x4, offset = 0x4, fixed_abs, tag = 'smem constant byte address 0x4 - core index']
  #allocation1 [shape = 'u32[144,128]{1,0:T(1,128)}', space=vmem, size = 0x12000, scoped, tag = 'internal scratch']
  %s0 = inlined_call_operand.vmem [shape: f32[2,4,3,256], index: 0, kind: input, shape index: {}]
  %s1 = inlined_call_operand.vmem [shape: f32[2,3,256], index: 1, kind: input, shape index: {}]
  %s2 = inlined_call_operand.vmem [shape: f32[1,3,256], index: 2, kind: output, shape index: {}]
  %s3 = sld [smem:[#allocation0]]
  $region18: #{loss_anneal.1} parent=0
    _
  %s5 = ssub.s32 1, %s3
  %s6 = scalar_select 0, %s5, %s3
  // Predicated region
  $region2: #{loss_anneal.1} parent=0 // pred_check
    _
  $region3: #{loss_anneal.1} parent=0 // pred_check_branch
    %8 = sbr.rel (0) target = $region5
  $region4: #{loss_anneal.1} parent=0 // pred_region
    _
  $region5: #{loss_anneal.1} parent=0 // pred_fallthru
    _
  // Predicated region
  $region6: #{loss_anneal.1} parent=0 // pred_check
    _
  $region7: #{loss_anneal.1} parent=0 // pred_check_branch
    %10 = sbr.rel (0) target = $region9
  $region8: #{loss_anneal.1} parent=0 // pred_region
    _
  $region9: #{loss_anneal.1} parent=0 // pred_fallthru
    _
  %v11 = vlaneseq
  %v12 = vand.u32 %v11, 127
  %v13 = vadd.s32 %v12, 128
  %v14 = vand.u32 %v12, 15
  %v15 = vand.u32 %v13, 15
  %vm16 = vcmp.eq.s32.totalorder %v14, 0
  %vm17 = vcmp.eq.s32.totalorder %v15, 0
  %vm18 = vcmp.lt.s32.totalorder %v12, 16
  %vm19 = vcmp.lt.s32.totalorder %v13, 16
  %v20 = vld [vmem:[%s1] sm:$0x77]
  %v21 = vld [vmem:[%s1 + $0x8] sm:$0x77]
  %v22 = vld [vmem:[%s0] sm:$0x77]
  %v23 = vld [vmem:[%s0 + $0x8] sm:$0x77]
  %v24 = vld [vmem:[%s0 + $0x10] sm:$0x77]
  %v25 = vld [vmem:[%s0 + $0x18] sm:$0x77]
  %v26 = vld [vmem:[%s0 + $0x20] sm:$0x77]
  %v27 = vld [vmem:[%s0 + $0x28] sm:$0x77]
  %v28 = vld [vmem:[%s0 + $0x30] sm:$0x77]
  %v29 = vld [vmem:[%s0 + $0x38] sm:$0x77]
  %v32 = vcombine.high %v20, %v20
  %v33 = vcombine.high %v21, %v21
  %36 = vrot.lane.b32.xlu0 %v20, 1
  %v37 = vpop.permute.xlu0 %36
  %38 = vrot.lane.b32.xlu0 %v21, 1
  %v39 = vpop.permute.xlu0 %38
  %40 = vrot.lane.b32.xlu0 %v32, 1
  %v41 = vpop.permute.xlu0 %40
  %42 = vrot.lane.b32.xlu0 %v33, 1
  %v43 = vpop.permute.xlu0 %42
  %vm44 = vcmp.lt.s32.totalorder %v12, 1
  %v45 = vsel %vm44, %v37, %v41
  %v46 = vsel %vm44, %v39, %v43
  %v47 = vsel %vm44, %v41, %v37
  %v48 = vsel %vm44, %v43, %v39
  %v49 = vsel %vm16, 1, 0
  %v50 = vsel %vm17, 1, 0
  %vm51 = vcmp.eq.s32.totalorder %v49, 1
  %vm52 = vcmp.eq.s32.totalorder %v50, 1
  %v53 = vsel %vm51, 0.0, %v47
  %v54 = vsel %vm52, 0.0, %v45
  %v55 = vsel %vm51, 0.0, %v48
  %v56 = vsel %vm52, 0.0, %v46
  %57 = vrot.lane.b32.xlu0 %v20, 16
  %v58 = vpop.permute.xlu0 %57
  %59 = vrot.lane.b32.xlu0 %v21, 16
  %v60 = vpop.permute.xlu0 %59
  %61 = vrot.lane.b32.xlu0 %v32, 16
  %v62 = vpop.permute.xlu0 %61
  %63 = vrot.lane.b32.xlu0 %v33, 16
  %v64 = vpop.permute.xlu0 %63
  %v65 = vsel %vm18, %v58, %v62
  %v66 = vsel %vm18, %v60, %v64
  %v67 = vsel %vm18, %v62, %v58
  %v68 = vsel %vm18, %v64, %v60
  %v69 = vsel %vm18, 1, 0
  %v70 = vsel %vm19, 1, 0
  %vm71 = vcmp.eq.s32.totalorder %v69, 1
  %vm72 = vcmp.eq.s32.totalorder %v70, 1
  %v73 = vsel %vm71, 0.0, %v67
  %v74 = vsel %vm72, 0.0, %v65
  %v75 = vsel %vm71, 0.0, %v68
  %v76 = vsel %vm72, 0.0, %v66
  %v77 = vsub.f32 %v53, %v20
  %v78 = vsub.f32 %v54, %v32
  %v79 = vsub.f32 %v55, %v21
  %v80 = vsub.f32 %v56, %v33
  %v81 = vand.u32 2147483647, %v77
  %v82 = vand.u32 2147483647, %v78
  %v83 = vand.u32 2147483647, %v79
  %v84 = vand.u32 2147483647, %v80
  %v85 = vsub.f32 %v73, %v20
  %v86 = vsub.f32 %v74, %v32
  %v87 = vsub.f32 %v75, %v21
  %v88 = vsub.f32 %v76, %v33
  %v89 = vand.u32 2147483647, %v85
  %v90 = vand.u32 2147483647, %v86
  %v91 = vand.u32 2147483647, %v87
  %v92 = vand.u32 2147483647, %v88
  %v93 = vadd.f32 %v81, %v89
  %v94 = vadd.f32 %v82, %v90
  %v95 = vadd.f32 %v83, %v91
  %v96 = vadd.f32 %v84, %v92
  %v97 = vsub.f32 %v22, %v20
  %v98 = vsub.f32 %v23, %v20
  %v99 = vsub.f32 %v24, %v20
  %v100 = vsub.f32 %v25, %v20
  %v101 = vsub.f32 %v26, %v21
  %v102 = vsub.f32 %v27, %v21
  %v103 = vsub.f32 %v28, %v21
  %v104 = vsub.f32 %v29, %v21
  %v105 = vmul.f32 %v97, %v97
  %v106 = vmul.f32 %v98, %v98
  %v107 = vmul.f32 %v99, %v99
  %v108 = vmul.f32 %v100, %v100
  %v109 = vmul.f32 %v101, %v101
  %v110 = vmul.f32 %v102, %v102
  %v111 = vmul.f32 %v103, %v103
  %v112 = vmul.f32 %v104, %v104
  %v121 = vcombine.high %v22, %v22
  %v122 = vcombine.high %v23, %v23
  %v123 = vcombine.high %v24, %v24
  %v124 = vcombine.high %v25, %v25
  %v125 = vcombine.high %v26, %v26
  %v126 = vcombine.high %v27, %v27
  %v127 = vcombine.high %v28, %v28
  %v128 = vcombine.high %v29, %v29
  %137 = vrot.lane.b32.xlu0 %v22, 1
  %v138 = vpop.permute.xlu0 %137
  %139 = vrot.lane.b32.xlu0 %v23, 1
  %v140 = vpop.permute.xlu0 %139
  %141 = vrot.lane.b32.xlu0 %v24, 1
  %v142 = vpop.permute.xlu0 %141
  %143 = vrot.lane.b32.xlu0 %v25, 1
  %v144 = vpop.permute.xlu0 %143
  %145 = vrot.lane.b32.xlu0 %v26, 1
  %v146 = vpop.permute.xlu0 %145
  %147 = vrot.lane.b32.xlu0 %v27, 1
  %v148 = vpop.permute.xlu0 %147
  %149 = vrot.lane.b32.xlu0 %v28, 1
  %v150 = vpop.permute.xlu0 %149
  %151 = vrot.lane.b32.xlu0 %v29, 1
  %v152 = vpop.permute.xlu0 %151
  %153 = vrot.lane.b32.xlu0 %v121, 1
  %v154 = vpop.permute.xlu0 %153
  %155 = vrot.lane.b32.xlu0 %v122, 1
  %v156 = vpop.permute.xlu0 %155
  %157 = vrot.lane.b32.xlu0 %v123, 1
  %v158 = vpop.permute.xlu0 %157
  %159 = vrot.lane.b32.xlu0 %v124, 1
  %v160 = vpop.permute.xlu0 %159
  %161 = vrot.lane.b32.xlu0 %v125, 1
  %v162 = vpop.permute.xlu0 %161
  %163 = vrot.lane.b32.xlu0 %v126, 1
  %v164 = vpop.permute.xlu0 %163
  %165 = vrot.lane.b32.xlu0 %v127, 1
  %v166 = vpop.permute.xlu0 %165
  %167 = vrot.lane.b32.xlu0 %v128, 1
  %v168 = vpop.permute.xlu0 %167
  %v169 = vsel %vm44, %v138, %v154
  %v170 = vsel %vm44, %v140, %v156
  %v171 = vsel %vm44, %v142, %v158
  %v172 = vsel %vm44, %v144, %v160
  %v173 = vsel %vm44, %v146, %v162
  %v174 = vsel %vm44, %v148, %v164
  %v175 = vsel %vm44, %v150, %v166
  %v176 = vsel %vm44, %v152, %v168
  %v177 = vsel %vm44, %v154, %v138
  %v178 = vsel %vm44, %v156, %v140
  %v179 = vsel %vm44, %v158, %v142
  %v180 = vsel %vm44, %v160, %v144
  %v181 = vsel %vm44, %v162, %v146
  %v182 = vsel %vm44, %v164, %v148
  %v183 = vsel %vm44, %v166, %v150
  %v184 = vsel %vm44, %v168, %v152
  %v185 = vsel %vm51, 0.0, %v177
  %v186 = vsel %vm52, 0.0, %v169
  %v187 = vsel %vm51, 0.0, %v178
  %v188 = vsel %vm52, 0.0, %v170
  %v189 = vsel %vm51, 0.0, %v179
  %v190 = vsel %vm52, 0.0, %v171
  %v191 = vsel %vm51, 0.0, %v180
  %v192 = vsel %vm52, 0.0, %v172
  %v193 = vsel %vm51, 0.0, %v181
  %v194 = vsel %vm52, 0.0, %v173
  %v195 = vsel %vm51, 0.0, %v182
  %v196 = vsel %vm52, 0.0, %v174
  %v197 = vsel %vm51, 0.0, %v183
  %v198 = vsel %vm52, 0.0, %v175
  %v199 = vsel %vm51, 0.0, %v184
  %v200 = vsel %vm52, 0.0, %v176
  %201 = vrot.lane.b32.xlu0 %v22, 16
  %v202 = vpop.permute.xlu0 %201
  %203 = vrot.lane.b32.xlu0 %v23, 16
  %v204 = vpop.permute.xlu0 %203
  %205 = vrot.lane.b32.xlu0 %v24, 16
  %v206 = vpop.permute.xlu0 %205
  %207 = vrot.lane.b32.xlu0 %v25, 16
  %v208 = vpop.permute.xlu0 %207
  %209 = vrot.lane.b32.xlu0 %v26, 16
  %v210 = vpop.permute.xlu0 %209
  %211 = vrot.lane.b32.xlu0 %v27, 16
  %v212 = vpop.permute.xlu0 %211
  %213 = vrot.lane.b32.xlu0 %v28, 16
  %v214 = vpop.permute.xlu0 %213
  %215 = vrot.lane.b32.xlu0 %v29, 16
  %v216 = vpop.permute.xlu0 %215
  %217 = vrot.lane.b32.xlu0 %v121, 16
  %v218 = vpop.permute.xlu0 %217
  %219 = vrot.lane.b32.xlu0 %v122, 16
  %v220 = vpop.permute.xlu0 %219
  %221 = vrot.lane.b32.xlu0 %v123, 16
  %v222 = vpop.permute.xlu0 %221
  %223 = vrot.lane.b32.xlu0 %v124, 16
  %v224 = vpop.permute.xlu0 %223
  %225 = vrot.lane.b32.xlu0 %v125, 16
  %v226 = vpop.permute.xlu0 %225
  %227 = vrot.lane.b32.xlu0 %v126, 16
  %v228 = vpop.permute.xlu0 %227
  %229 = vrot.lane.b32.xlu0 %v127, 16
  %v230 = vpop.permute.xlu0 %229
  %231 = vrot.lane.b32.xlu0 %v128, 16
  %v232 = vpop.permute.xlu0 %231
  %v233 = vsel %vm18, %v202, %v218
  %v234 = vsel %vm18, %v204, %v220
  %v235 = vsel %vm18, %v206, %v222
  %v236 = vsel %vm18, %v208, %v224
  %v237 = vsel %vm18, %v210, %v226
  %v238 = vsel %vm18, %v212, %v228
  %v239 = vsel %vm18, %v214, %v230
  %v240 = vsel %vm18, %v216, %v232
  %v241 = vsel %vm18, %v218, %v202
  %v242 = vsel %vm18, %v220, %v204
  %v243 = vsel %vm18, %v222, %v206
  %v244 = vsel %vm18, %v224, %v208
  %v245 = vsel %vm18, %v226, %v210
  %v246 = vsel %vm18, %v228, %v212
  %v247 = vsel %vm18, %v230, %v214
  %v248 = vsel %vm18, %v232, %v216
  %v249 = vsel %vm71, 0.0, %v241
  %v250 = vsel %vm72, 0.0, %v233
  %v251 = vsel %vm71, 0.0, %v242
  %v252 = vsel %vm72, 0.0, %v234
  %v253 = vsel %vm71, 0.0, %v243
  %v254 = vsel %vm72, 0.0, %v235
  %v255 = vsel %vm71, 0.0, %v244
  %v256 = vsel %vm72, 0.0, %v236
  %v257 = vsel %vm71, 0.0, %v245
  %v258 = vsel %vm72, 0.0, %v237
  %v259 = vsel %vm71, 0.0, %v246
  %v260 = vsel %vm72, 0.0, %v238
  %v261 = vsel %vm71, 0.0, %v247
  %v262 = vsel %vm72, 0.0, %v239
  %v263 = vsel %vm71, 0.0, %v248
  %v264 = vsel %vm72, 0.0, %v240
  %v265 = vsub.f32 %v185, %v22
  %v266 = vsub.f32 %v186, %v121
  %v267 = vsub.f32 %v187, %v23
  %v268 = vsub.f32 %v188, %v122
  %v269 = vsub.f32 %v189, %v24
  %v270 = vsub.f32 %v190, %v123
  %v271 = vsub.f32 %v191, %v25
  %v272 = vsub.f32 %v192, %v124
  %v273 = vsub.f32 %v193, %v26
  %v274 = vsub.f32 %v194, %v125
  %v275 = vsub.f32 %v195, %v27
  %v276 = vsub.f32 %v196, %v126
  %v277 = vsub.f32 %v197, %v28
  %v278 = vsub.f32 %v198, %v127
  %v279 = vsub.f32 %v199, %v29
  %v280 = vsub.f32 %v200, %v128
  %v281 = vand.u32 2147483647, %v265
  %v282 = vand.u32 2147483647, %v266
  %v283 = vand.u32 2147483647, %v267
  %v284 = vand.u32 2147483647, %v268
  %v285 = vand.u32 2147483647, %v269
  %v286 = vand.u32 2147483647, %v270
  %v287 = vand.u32 2147483647, %v271
  %v288 = vand.u32 2147483647, %v272
  %v289 = vand.u32 2147483647, %v273
  %v290 = vand.u32 2147483647, %v274
  %v291 = vand.u32 2147483647, %v275
  %v292 = vand.u32 2147483647, %v276
  %v293 = vand.u32 2147483647, %v277
  %v294 = vand.u32 2147483647, %v278
  %v295 = vand.u32 2147483647, %v279
  %v296 = vand.u32 2147483647, %v280
  %v297 = vsub.f32 %v249, %v22
  %v298 = vsub.f32 %v250, %v121
  %v299 = vsub.f32 %v251, %v23
  %v300 = vsub.f32 %v252, %v122
  %v301 = vsub.f32 %v253, %v24
  %v302 = vsub.f32 %v254, %v123
  %v303 = vsub.f32 %v255, %v25
  %v304 = vsub.f32 %v256, %v124
  %v305 = vsub.f32 %v257, %v26
  %v306 = vsub.f32 %v258, %v125
  %v307 = vsub.f32 %v259, %v27
  %v308 = vsub.f32 %v260, %v126
  %v309 = vsub.f32 %v261, %v28
  %v310 = vsub.f32 %v262, %v127
  %v311 = vsub.f32 %v263, %v29
  %v312 = vsub.f32 %v264, %v128
  %v313 = vand.u32 2147483647, %v297
  %v314 = vand.u32 2147483647, %v298
  %v315 = vand.u32 2147483647, %v299
  %v316 = vand.u32 2147483647, %v300
  %v317 = vand.u32 2147483647, %v301
  %v318 = vand.u32 2147483647, %v302
  %v319 = vand.u32 2147483647, %v303
  %v320 = vand.u32 2147483647, %v304
  %v321 = vand.u32 2147483647, %v305
  %v322 = vand.u32 2147483647, %v306
  %v323 = vand.u32 2147483647, %v307
  %v324 = vand.u32 2147483647, %v308
  %v325 = vand.u32 2147483647, %v309
  %v326 = vand.u32 2147483647, %v310
  %v327 = vand.u32 2147483647, %v311
  %v328 = vand.u32 2147483647, %v312
  %v329 = vadd.f32 %v281, %v313
  %v330 = vadd.f32 %v282, %v314
  %v331 = vadd.f32 %v283, %v315
  %v332 = vadd.f32 %v284, %v316
  %v333 = vadd.f32 %v285, %v317
  %v334 = vadd.f32 %v286, %v318
  %v335 = vadd.f32 %v287, %v319
  %v336 = vadd.f32 %v288, %v320
  %v337 = vadd.f32 %v289, %v321
  %v338 = vadd.f32 %v290, %v322
  %v339 = vadd.f32 %v291, %v323
  %v340 = vadd.f32 %v292, %v324
  %v341 = vadd.f32 %v293, %v325
  %v342 = vadd.f32 %v294, %v326
  %v343 = vadd.f32 %v295, %v327
  %v344 = vadd.f32 %v296, %v328
  %v345 = vsub.f32 %v329, %v93
  %v346 = vsub.f32 %v330, %v94
  %v347 = vsub.f32 %v331, %v93
  %v348 = vsub.f32 %v332, %v94
  %v349 = vsub.f32 %v333, %v93
  %v350 = vsub.f32 %v334, %v94
  %v351 = vsub.f32 %v335, %v93
  %v352 = vsub.f32 %v336, %v94
  %v353 = vsub.f32 %v337, %v95
  %v354 = vsub.f32 %v338, %v96
  %v355 = vsub.f32 %v339, %v95
  %v356 = vsub.f32 %v340, %v96
  %v357 = vsub.f32 %v341, %v95
  %v358 = vsub.f32 %v342, %v96
  %v359 = vsub.f32 %v343, %v95
  %v360 = vsub.f32 %v344, %v96
  %v361 = vand.u32 2147483647, %v345
  %v362 = vand.u32 2147483647, %v346
  %v363 = vand.u32 2147483647, %v347
  %v364 = vand.u32 2147483647, %v348
  %v365 = vand.u32 2147483647, %v349
  %v366 = vand.u32 2147483647, %v350
  %v367 = vand.u32 2147483647, %v351
  %v368 = vand.u32 2147483647, %v352
  %v369 = vand.u32 2147483647, %v353
  %v370 = vand.u32 2147483647, %v354
  %v371 = vand.u32 2147483647, %v355
  %v372 = vand.u32 2147483647, %v356
  %v373 = vand.u32 2147483647, %v357
  %v374 = vand.u32 2147483647, %v358
  %v375 = vand.u32 2147483647, %v359
  %v376 = vand.u32 2147483647, %v360
  %v393 = vcombine.low %v361, %v362
  %v394 = vcombine.low %v363, %v364
  %v395 = vcombine.low %v365, %v366
  %v396 = vcombine.low %v367, %v368
  %v397 = vcombine.low %v369, %v370
  %v398 = vcombine.low %v371, %v372
  %v399 = vcombine.low %v373, %v374
  %v400 = vcombine.low %v375, %v376
  %v409 = vadd.f32 %v105, %v393
  %v410 = vadd.f32 %v106, %v394
  %v411 = vadd.f32 %v107, %v395
  %v412 = vadd.f32 %v108, %v396
  %v413 = vadd.f32 %v109, %v397
  %v414 = vadd.f32 %v110, %v398
  %v415 = vadd.f32 %v111, %v399
  %v416 = vadd.f32 %v112, %v400
  %v425 = vcombine.high %v409, %v409
  %v426 = vcombine.high %v410, %v410
  %v427 = vcombine.high %v411, %v411
  %v428 = vcombine.high %v412, %v412
  %v429 = vcombine.high %v413, %v413
  %v430 = vcombine.high %v414, %v414
  %v431 = vcombine.high %v415, %v415
  %v432 = vcombine.high %v416, %v416
  %vm441 = vcmask 1042432
  %v442 = vsel %vm441, %v409, 0.0
  %v443 = vsel %vm441, %v410, 0.0
  %v444 = vadd.f32 %v442, %v443
  %v445 = vsel %vm441, %v411, 0.0
  %v446 = vadd.f32 %v444, %v445
  %v447 = vsel %vm441, %v412, 0.0
  %v448 = vadd.f32 %v446, %v447
  %v449 = vsel %vm441, %v413, 0.0
  %v450 = vadd.f32 %v448, %v449
  %v451 = vsel %vm441, %v414, 0.0
  %v452 = vadd.f32 %v450, %v451
  %v453 = vsel %vm441, %v415, 0.0
  %v454 = vadd.f32 %v452, %v453
  %v455 = vsel %vm441, %v416, 0.0
  %v456 = vadd.f32 %v454, %v455
  %v457 = vsel %vm441, %v425, 0.0
  %v458 = vsel %vm441, %v426, 0.0
  %v459 = vadd.f32 %v457, %v458
  %v460 = vsel %vm441, %v427, 0.0
  %v461 = vadd.f32 %v459, %v460
  %v462 = vsel %vm441, %v428, 0.0
  %v463 = vadd.f32 %v461, %v462
  %v464 = vsel %vm441, %v429, 0.0
  %v465 = vadd.f32 %v463, %v464
  %v466 = vsel %vm441, %v430, 0.0
  %v467 = vadd.f32 %v465, %v466
  %v468 = vsel %vm441, %v431, 0.0
  %v469 = vadd.f32 %v467, %v468
  %v470 = vsel %vm441, %v432, 0.0
  %v471 = vadd.f32 %v469, %v470
  %v474 = vcombine.low %v456, %v471
  %476 = vst [vmem:[%s2] sm:$0x77] %v474
  // Predicated region
  $region10: #{loss_anneal.1} parent=0 // pred_check
    _
  $region11: #{loss_anneal.1} parent=0 // pred_check_branch
    %478 = sbr.rel (0) target = $region13
  $region12: #{loss_anneal.1} parent=0 // pred_region
    _
  $region13: #{loss_anneal.1} parent=0 // pred_fallthru
    _
  // Predicated region
  $region14: #{loss_anneal.1} parent=0 // pred_check
    _
  $region15: #{loss_anneal.1} parent=0 // pred_check_branch
    %480 = sbr.rel (0) target = $region17
  $region16: #{loss_anneal.1} parent=0 // pred_region
    _
  $region17: #{loss_anneal.1} parent=0 // pred_fallthru
    _

</llo_original>
